<compile_context>
chip_gen: v7x
topology: tpu7x:2x2x1
jax: 0.10.0
libtpu: 0.0.40
codegen_flags: <defaults>
</compile_context>

<pallas_src>
from functools import partial

import numpy as np
import jax
import jax.numpy as jnp
from jax.experimental import pallas as pl
from jax.experimental.pallas import tpu as pltpu

EMB_DIM = 32       # emb_hidden_dim
HIDDEN = 64        # hidden_size
OUT = 1            # output_size
BY_DISC = 4        # num_birthyear_disc
NUM_SYMP = 15      # rm_feature=-999 not in range(2,17) -> 15 symptom embeddings
NUM_OPTIONS = 3    # replace_missing_value == 'replace'
IN_FEATS = 17
K_ONEHOT = BY_DISC + 2 + NUM_SYMP * NUM_OPTIONS   # 51


def mlp_regressor_kernel(x_ref, sel_ref, val_ref, wf_ref, b1_ref, w2_ref,
                         b2_ref, out_ref):
    # Gather the x column each one-hot lane needs: (51,TB) = (51,17)@(17,TB).
    # Both operands bf16 (exact: 0/1 selection matrix, 0/1/2 codes) -> single
    # MXU pass instead of the f32 multi-pass decomposition.
    x_g = jnp.dot(sel_ref[...], x_ref[...], preferred_element_type=jnp.float32)
    # Build the concatenated one-hot in VMEM (VPU compare) — exact: each x_g
    # entry is a single x value copied through a 0/1 dot.
    oh = (x_g == val_ref[...]).astype(jnp.float32)                    # (51, TB)
    # Fused embeddings + means + fc1: (64,TB) = (64,51)@(51,TB).  Kept f32
    # (precision-gated per review; bf16 here would risk the 1e-3 tolerance).
    h = jnp.dot(wf_ref[...], oh, preferred_element_type=jnp.float32) + b1_ref[...]
    h = jnp.maximum(h, 0.0)
    # TODO(synk): dropout with p > 0 would need pltpu.prng_seed/prng_random_bits here.
    # fc2 (N=1) on VPU + reduce instead of a 1/256-utilized MXU column; the
    # (1, TB) result keeps the output store lane-dense.
    out_ref[...] = jnp.sum(h * w2_ref[...], axis=0, keepdims=True) + b2_ref[...]


def _selection_constants():
    """Constant 17->51 column-selection matrix (bf16) and per-lane compare values."""
    cols = np.concatenate([
        np.arange(BY_DISC),                                # birth cols 0..3
        np.full(2, BY_DISC),                               # gender col 4 (x2)
        2 + np.repeat(np.arange(NUM_SYMP), NUM_OPTIONS),   # symptom i -> col 2+i
    ])
    vals = np.concatenate([
        np.ones(BY_DISC),                                  # birth one-hot: == 1
        np.arange(2),                                      # gender: == 0, 1
        np.tile(np.arange(NUM_OPTIONS), NUM_SYMP),         # symptoms: == 0,1,2
    ]).astype(np.float32)
    sel = np.zeros((IN_FEATS, K_ONEHOT), np.float32)
    sel[cols, np.arange(K_ONEHOT)] = 1.0
    return (jnp.asarray(sel.T, dtype=jnp.bfloat16),        # 0/1: exact in bf16
            jnp.asarray(vals).reshape(K_ONEHOT, 1))


def _round_up(n, m):
    return ((n + m - 1) // m) * m


@partial(jax.jit, static_argnames=("tb",))
def mlp_regressor_forward(x, params, tb=8192):
    """x: (B, 17) float32 feature matrix. Returns (B, 1) float32."""
    B = x.shape[0]

    # --- wrapper-side algebraic fusion of embeddings + means + fc1 ---
    # (constant-folded once under jit)
    w_symp_cat = params['w_symp'].reshape(NUM_SYMP * NUM_OPTIONS, EMB_DIM)
    w_cat = jnp.concatenate(
        [params['w_birth'] * (1.0 / 3.0),
         params['w_gender'] * (1.0 / 3.0),
         w_symp_cat * (1.0 / (3.0 * NUM_SYMP))], axis=0)              # (51, 32)
    w_fused_t = (w_cat @ params['w1']).T.astype(jnp.float32)          # (64, 51)
    b1_col = params['b1'].reshape(HIDDEN, 1).astype(jnp.float32)
    w2_col = params['w2'].reshape(HIDDEN, OUT).astype(jnp.float32)    # (64, 1)
    b2 = params['b2'].reshape(1, OUT).astype(jnp.float32)
    sel_t, val_col = _selection_constants()

    # --- tile selection: big tile (amortize per-step overhead) but keep the
    #     grid >= 2 steps when the batch allows it (v7x megacore split) ---
    tb = _round_up(max(tb, 128), 128)
    tb_eff = max(128, min(tb, _round_up(pl.cdiv(B, 2), 128)))
    n_tiles = pl.cdiv(B, tb_eff)
    b_pad = n_tiles * tb_eff

    # --- batch on lanes: one fused pad+transpose+cast (no zeros+set pass).
    #     bf16 is exact for the 0/1/2 feature codes and halves HBM traffic. ---
    xp = x if b_pad == B else jnp.pad(x, ((0, b_pad - B), (0, 0)))
    x_t = xp.T.astype(jnp.bfloat16)                                   # (17, b_pad)

    def const(shape):                      # weight-style spec: stays resident
        return pl.BlockSpec(shape, lambda i: (0, 0))

    out = pl.pallas_call(
        mlp_regressor_kernel,
        out_shape=jax.ShapeDtypeStruct((1, b_pad), jnp.float32),
        grid=(n_tiles,),
        in_specs=[
            pl.BlockSpec((IN_FEATS, tb_eff), lambda i: (0, i)),   # x tile (17, TB)
            const((K_ONEHOT, IN_FEATS)),                          # selection (51, 17)
            const((K_ONEHOT, 1)),                                 # compare values
            const((HIDDEN, K_ONEHOT)),                            # fused fc1 weights
            const((HIDDEN, 1)),                                   # b1
            const((HIDDEN, OUT)),                                 # w2
            const((1, OUT)),                                      # b2
        ],
        out_specs=pl.BlockSpec((1, tb_eff), lambda i: (0, i)),    # lane-dense store
        compiler_params=pltpu.CompilerParams(
            dimension_semantics=("parallel",)),                   # v7x: 2 TCs split batch
    )(x_t, sel_t, val_col, w_fused_t, b1_col, w2_col, b2)

    return out[0, :B].reshape(B, OUT)


def mlp_regressor_reference(x, params):
    """Pure-JAX reference (same math as the PyTorch forward)."""
    birth_idx = jnp.argmax(x[:, :BY_DISC] == 1, axis=1)
    birth = params['w_birth'][birth_idx]
    gender = params['w_gender'][x[:, BY_DISC].astype(jnp.int32)]
    symp_idx = x[:, -NUM_SYMP:].astype(jnp.int32)                     # (B, 15)
    symp = jnp.mean(
        jnp.stack([params['w_symp'][i][symp_idx[:, i]] for i in range(NUM_SYMP)]),
        axis=0)
    h = jnp.mean(jnp.stack([birth, gender, symp]), axis=0)
    h = jnp.maximum(h @ params['w1'] + params['b1'], 0.0)
    return h @ params['w2'] + params['b2']


if __name__ == "__main__":
    key = jax.random.PRNGKey(0)
    kp, kx1, kx2, kx3 = jax.random.split(key, 4)
    keys = jax.random.split(kp, 7)

    # deterministic synthetic parameters (shapes from the module's __init__)
    params = {
        'w_birth':  jax.random.normal(keys[0], (BY_DISC, EMB_DIM), jnp.float32),
        'w_gender': jax.random.normal(keys[1], (2, EMB_DIM), jnp.float32),
        'w_symp':   jax.random.normal(keys[2], (NUM_SYMP, NUM_OPTIONS, EMB_DIM),
                                      jnp.float32),
        'w1': jax.random.normal(keys[3], (EMB_DIM, HIDDEN), jnp.float32) * 0.1,
        'b1': jax.random.normal(keys[4], (HIDDEN,), jnp.float32) * 0.1,
        'w2': jax.random.normal(keys[5], (HIDDEN, OUT), jnp.float32) * 0.1,
        'b2': jax.random.normal(keys[6], (OUT,), jnp.float32) * 0.1,
    }

    # deterministic input (B, 17): cols 0..3 one-hot birth-year, col 4 gender,
    # cols 5..16 symptom codes in {0,1,2} (cols 2..4 double as symptoms 0..2,
    # exactly as the PyTorch indexing implies).
    B = 8
    birth_idx = jax.random.randint(kx1, (B,), 0, BY_DISC)
    gender = jax.random.randint(kx2, (B,), 0, 2)
    symp_tail = jax.random.randint(kx3, (B, 12), 0, NUM_OPTIONS)
    x = jnp.zeros((B, IN_FEATS), jnp.float32)
    x = x.at[jnp.arange(B), birth_idx].set(1.0)
    x = x.at[:, BY_DISC].set(gender.astype(jnp.float32))
    x = x.at[:, 5:].set(symp_tail.astype(jnp.float32))

    out = mlp_regressor_forward(x, params)
    jax.block_until_ready(out)

    ref = mlp_regressor_reference(x, params)
    assert out.shape == (B, OUT)
    assert jnp.allclose(out, ref, rtol=1e-3, atol=1e-3)
    print("KERNEL_OK")
</pallas_src>

<mosaic_0001>
module attributes {stable_mosaic.version = 11 : i64} {
  func.func @mlp_regressor_kernel(%arg0: i32, %arg1: memref<17x128xbf16, #tpu.memory_space<vmem>>, %arg2: memref<51x17xbf16, #tpu.memory_space<vmem>>, %arg3: memref<51x1xf32, #tpu.memory_space<vmem>>, %arg4: memref<64x51xf32, #tpu.memory_space<vmem>>, %arg5: memref<64x1xf32, #tpu.memory_space<vmem>>, %arg6: memref<64x1xf32, #tpu.memory_space<vmem>>, %arg7: memref<1x1xf32, #tpu.memory_space<vmem>>, %arg8: memref<1x128xf32, #tpu.memory_space<vmem>>) attributes {dimension_semantics = [#tpu.dimension_semantics<parallel>], iteration_bounds = array<i64: 1>, scalar_prefetch = 0 : i64, scratch_operands = 0 : i64, tpu.core_type = #tpu.core_type<tc>, window_params = [{transform_indices = @transform_0, window_bounds = array<i64: 17, 128>}, {pipeline_mode = #tpu.pipeline_mode<synchronous>, transform_indices = @transform_1, window_bounds = array<i64: 51, 17>}, {pipeline_mode = #tpu.pipeline_mode<synchronous>, transform_indices = @transform_2, window_bounds = array<i64: 51, 1>}, {pipeline_mode = #tpu.pipeline_mode<synchronous>, transform_indices = @transform_3, window_bounds = array<i64: 64, 51>}, {pipeline_mode = #tpu.pipeline_mode<synchronous>, transform_indices = @transform_4, window_bounds = array<i64: 64, 1>}, {pipeline_mode = #tpu.pipeline_mode<synchronous>, transform_indices = @transform_5, window_bounds = array<i64: 64, 1>}, {pipeline_mode = #tpu.pipeline_mode<synchronous>, transform_indices = @transform_6, window_bounds = array<i64: 1, 1>}, {transform_indices = @transform_7, window_bounds = array<i64: 1, 128>}]} {
    %c0 = arith.constant 0 : index
    %c0_0 = arith.constant 0 : index
    %0 = vector.load %arg2[%c0, %c0_0] : memref<51x17xbf16, #tpu.memory_space<vmem>>, vector<51x17xbf16>
    %c0_1 = arith.constant 0 : index
    %c0_2 = arith.constant 0 : index
    %1 = vector.load %arg1[%c0_1, %c0_2] : memref<17x128xbf16, #tpu.memory_space<vmem>>, vector<17x128xbf16>
    %cst = arith.constant dense<0.000000e+00> : vector<51x128xf32>
    %2 = tpu.matmul %0, %1, %cst {dimension_numbers = #tpu.dot_dimension_numbers<[1], [0], [0], [1], [0, 0, 1, 1], [], []>} : vector<51x17xbf16>, vector<17x128xbf16>, vector<51x128xf32> -> vector<51x128xf32>
    %c0_3 = arith.constant 0 : index
    %c0_4 = arith.constant 0 : index
    %3 = vector.load %arg3[%c0_3, %c0_4] : memref<51x1xf32, #tpu.memory_space<vmem>>, vector<51x1xf32>
    %4 = vector.broadcast %3 : vector<51x1xf32> to vector<51x128xf32>
    %5 = arith.cmpf oeq, %2, %4 : vector<51x128xf32>
    %6 = arith.extui %5 : vector<51x128xi1> to vector<51x128xi32>
    %7 = arith.sitofp %6 : vector<51x128xi32> to vector<51x128xf32>
    %c0_5 = arith.constant 0 : index
    %c0_6 = arith.constant 0 : index
    %8 = vector.load %arg4[%c0_5, %c0_6] : memref<64x51xf32, #tpu.memory_space<vmem>>, vector<64x51xf32>
    %cst_7 = arith.constant dense<0.000000e+00> : vector<64x128xf32>
    %9 = tpu.matmul %8, %7, %cst_7 {dimension_numbers = #tpu.dot_dimension_numbers<[1], [0], [0], [1], [0, 0, 1, 1], [], []>} : vector<64x51xf32>, vector<51x128xf32>, vector<64x128xf32> -> vector<64x128xf32>
    %c0_8 = arith.constant 0 : index
    %c0_9 = arith.constant 0 : index
    %10 = vector.load %arg5[%c0_8, %c0_9] : memref<64x1xf32, #tpu.memory_space<vmem>>, vector<64x1xf32>
    %11 = vector.broadcast %10 : vector<64x1xf32> to vector<64x128xf32>
    %12 = arith.addf %9, %11 : vector<64x128xf32>
    %cst_10 = arith.constant 0.000000e+00 : f32
    %13 = vector.broadcast %cst_10 : f32 to vector<64x128xf32>
    %14 = arith.maximumf %12, %13 : vector<64x128xf32>
    %c0_11 = arith.constant 0 : index
    %c0_12 = arith.constant 0 : index
    %15 = vector.load %arg6[%c0_11, %c0_12] : memref<64x1xf32, #tpu.memory_space<vmem>>, vector<64x1xf32>
    %16 = vector.broadcast %15 : vector<64x1xf32> to vector<64x128xf32>
    %17 = arith.mulf %14, %16 : vector<64x128xf32>
    %cst_13 = arith.constant dense<0.000000e+00> : vector<128xf32>
    %18 = vector.multi_reduction <add>, %17, %cst_13 [0] : vector<64x128xf32> to vector<128xf32>
    %19 = vector.shape_cast %18 : vector<128xf32> to vector<1x128xf32>
    %c0_14 = arith.constant 0 : index
    %c0_15 = arith.constant 0 : index
    %20 = vector.load %arg7[%c0_14, %c0_15] : memref<1x1xf32, #tpu.memory_space<vmem>>, vector<1x1xf32>
    %21 = vector.broadcast %20 : vector<1x1xf32> to vector<1x128xf32>
    %22 = arith.addf %19, %21 : vector<1x128xf32>
    %c0_16 = arith.constant 0 : index
    %c0_17 = arith.constant 0 : index
    %23 = vector.load %arg8[%c0_16, %c0_17] : memref<1x128xf32, #tpu.memory_space<vmem>>, vector<1x128xf32>
    tpu.vector_store %arg8[%c0_16, %c0_17], %22 {strides = array<i32>} : memref<1x128xf32, #tpu.memory_space<vmem>>, vector<1x128xf32>,
    return
  }
  func.func @transform_0(%arg0: i32) -> (i32, i32) {
    %c0_i32 = arith.constant 0 : i32
    %c0_i32_0 = arith.constant 0 : i32
    return %c0_i32, %arg0 : i32, i32
  }
  func.func @transform_1(%arg0: i32) -> (i32, i32) {
    %c0_i32 = arith.constant 0 : i32
    %c0_i32_0 = arith.constant 0 : i32
    %c0_i32_1 = arith.constant 0 : i32
    return %c0_i32, %c0_i32_0 : i32, i32
  }
  func.func @transform_2(%arg0: i32) -> (i32, i32) {
    %c0_i32 = arith.constant 0 : i32
    %c0_i32_0 = arith.constant 0 : i32
    %c0_i32_1 = arith.constant 0 : i32
    return %c0_i32, %c0_i32_0 : i32, i32
  }
  func.func @transform_3(%arg0: i32) -> (i32, i32) {
    %c0_i32 = arith.constant 0 : i32
    %c0_i32_0 = arith.constant 0 : i32
    %c0_i32_1 = arith.constant 0 : i32
    return %c0_i32, %c0_i32_0 : i32, i32
  }
  func.func @transform_4(%arg0: i32) -> (i32, i32) {
    %c0_i32 = arith.constant 0 : i32
    %c0_i32_0 = arith.constant 0 : i32
    %c0_i32_1 = arith.constant 0 : i32
    return %c0_i32, %c0_i32_0 : i32, i32
  }
  func.func @transform_5(%arg0: i32) -> (i32, i32) {
    %c0_i32 = arith.constant 0 : i32
    %c0_i32_0 = arith.constant 0 : i32
    %c0_i32_1 = arith.constant 0 : i32
    return %c0_i32, %c0_i32_0 : i32, i32
  }
  func.func @transform_6(%arg0: i32) -> (i32, i32) {
    %c0_i32 = arith.constant 0 : i32
    %c0_i32_0 = arith.constant 0 : i32
    %c0_i32_1 = arith.constant 0 : i32
    return %c0_i32, %c0_i32_0 : i32, i32
  }
  func.func @transform_7(%arg0: i32) -> (i32, i32) {
    %c0_i32 = arith.constant 0 : i32
    %c0_i32_0 = arith.constant 0 : i32
    return %c0_i32, %arg0 : i32, i32
  }
}

</mosaic_0001>

<llo_original>
// kernel: mlp_regressor_forward.1
$region0: #{mlp_regressor_forward.1}
  #allocation0 [shape = 'u32[]', space=smem, size = 0x4, offset = 0x4, fixed_abs, tag = 'smem constant byte address 0x4 - core index']
  #allocation1 [shape = 'u32[144,128]{1,0:T(1,128)}', space=vmem, size = 0x12000, scoped, tag = 'internal scratch']
  #allocation2 [shape = 'f32[1,1]{1,0:T(1,128)S(1)}', space=vmem, size = 0x200, scoped, tag = 'scoped memory for mlp_regressor_forward.1']
  %s0 = inlined_call_operand.vmem [shape: bf16[17,128], index: 0, kind: input, shape index: {}]
  %s1 = inlined_call_operand.vmem [shape: bf16[51,17], index: 1, kind: input, shape index: {}]
  %s2 = inlined_call_operand.vmem [shape: f32[51,1], index: 2, kind: input, shape index: {}]
  %s3 = inlined_call_operand.vmem [shape: f32[64,51], index: 3, kind: input, shape index: {}]
  %s4 = inlined_call_operand.vmem [shape: f32[64,1], index: 4, kind: input, shape index: {}]
  %s5 = inlined_call_operand.vmem [shape: f32[64,1], index: 5, kind: input, shape index: {}]
  %s6 = inlined_call_operand.<no memory space> [shape: f32[1,1], index: 6, kind: input, shape index: {}]
  %s7 = inlined_call_operand.vmem [shape: f32[1,128], index: 7, kind: output, shape index: {}]
  %s8 = sld [smem:[#allocation0]]
  $region38: #{mlp_regressor_forward.1} parent=0
    _
  %s10 = ssub.s32 1, %s8
  %s11 = scalar_select 0, %s10, %s8
  %v12 = vstv %s6
  %13 = vst [vmem:[#allocation2] sm:$0x1] %v12
  // Predicated region
  $region2: #{mlp_regressor_forward.1} parent=0 // pred_check
    _
  $region3: #{mlp_regressor_forward.1} parent=0 // pred_check_branch
    %15 = sbr.rel (0) target = $region5
  $region4: #{mlp_regressor_forward.1} parent=0 // pred_region
    _
  $region5: #{mlp_regressor_forward.1} parent=0 // pred_fallthru
    _
  // Predicated region
  $region6: #{mlp_regressor_forward.1} parent=0 // pred_check
    _
  $region7: #{mlp_regressor_forward.1} parent=0 // pred_check_branch
    %17 = sbr.rel (0) target = $region9
  $region8: #{mlp_regressor_forward.1} parent=0 // pred_region
    _
  $region9: #{mlp_regressor_forward.1} parent=0 // pred_fallthru
    _
  // Predicated region
  $region10: #{mlp_regressor_forward.1} parent=0 // pred_check
    _
  $region11: #{mlp_regressor_forward.1} parent=0 // pred_check_branch
    %19 = sbr.rel (0) target = $region13
  $region12: #{mlp_regressor_forward.1} parent=0 // pred_region
    _
  $region13: #{mlp_regressor_forward.1} parent=0 // pred_fallthru
    _
  // Predicated region
  $region14: #{mlp_regressor_forward.1} parent=0 // pred_check
    _
  $region15: #{mlp_regressor_forward.1} parent=0 // pred_check_branch
    %21 = sbr.rel (0) target = $region17
  $region16: #{mlp_regressor_forward.1} parent=0 // pred_region
    _
  $region17: #{mlp_regressor_forward.1} parent=0 // pred_fallthru
    _
  // Predicated region
  $region18: #{mlp_regressor_forward.1} parent=0 // pred_check
    _
  $region19: #{mlp_regressor_forward.1} parent=0 // pred_check_branch
    %23 = sbr.rel (0) target = $region21
  $region20: #{mlp_regressor_forward.1} parent=0 // pred_region
    _
  $region21: #{mlp_regressor_forward.1} parent=0 // pred_fallthru
    _
  // Predicated region
  $region22: #{mlp_regressor_forward.1} parent=0 // pred_check
    _
  $region23: #{mlp_regressor_forward.1} parent=0 // pred_check_branch
    %25 = sbr.rel (0) target = $region25
  $region24: #{mlp_regressor_forward.1} parent=0 // pred_region
    _
  $region25: #{mlp_regressor_forward.1} parent=0 // pred_fallthru
    _
  // Predicated region
  $region26: #{mlp_regressor_forward.1} parent=0 // pred_check
    _
  $region27: #{mlp_regressor_forward.1} parent=0 // pred_check_branch
    %27 = sbr.rel (0) target = $region29
  $region28: #{mlp_regressor_forward.1} parent=0 // pred_region
    _
  $region29: #{mlp_regressor_forward.1} parent=0 // pred_fallthru
    _
  %v29 = vld [vmem:[%s1] sm:$0xf]
  %v30 = vld [vmem:[%s1 + $0x4] sm:$0xf]
  %v31 = vld [vmem:[%s1 + $0x8] sm:$0xf]
  %v32 = vld [vmem:[%s1 + $0xc] sm:$0xf]
  %v33 = vld [vmem:[%s1 + $0x10] sm:$0xf]
  %v34 = vld [vmem:[%s1 + $0x14] sm:$0xf]
  %v35 = vld [vmem:[%s1 + $0x18] sm:$0x3]
  %v36 = vld [vmem:[%s0] sm:$0xf]
  %v37 = vld [vmem:[%s0 + $0x4] sm:$0xf]
  %v38 = vld [vmem:[%s0 + $0x8] sm:$0x1]
  %v46 = vunpack.c.l.b16 %v29
  %v47 = vunpack.c.l.b16 %v30
  %v48 = vunpack.c.l.b16 %v31
  %v49 = vunpack.c.l.b16 %v32
  %v50 = vunpack.c.l.b16 %v33
  %v51 = vunpack.c.l.b16 %v34
  %v52 = vunpack.c.l.b16 %v35
  %v53 = vpack.c.b16 %v47, %v46
  %v54 = vpack.c.b16 %v49, %v48
  %v55 = vpack.c.b16 %v51, %v50
  %v56 = vpack.c.b16 %v52, %v52
  %v60 = vunpack.c.l.b16 %v36
  %v61 = vunpack.c.l.b16 %v37
  %v62 = vunpack.c.l.b16 %v38
  %v63 = vpack.c.b16 %v61, %v60
  %v64 = vpack.c.b16 %v62, %v62
  %vm66 = vcmask 138240
  %v68 = vsel %vm66, %v53, 0
  %v71 = vsel %vm66, %v54, 0
  %v74 = vsel %vm66, %v55, 0
  %v77 = vsel %vm66, %v56, 0
  %vm79 = vcmask 1040384
  %v80 = vsel 0, 4294967295, 65535
  %v81 = vsel %vm79, %v80, 0
  %v83 = vand.u32 %v64, %v81
  %85 = vmatprep.subr.bf16.mxu0 0
  %86 = vmatpush1.bf16.msra.mxu0 %v63
  %87 = vmatprep.subr.bf16.mxu0 0
  %88 = vmatpush1.bf16.msra.mxu0 %v83
  %89 = vmatprep.subr.bf16.mxu0 0
  %90 = vmatpush1.bf16.msra.mxu0 0
  %91 = vmatprep.subr.bf16.mxu0 0
  %92 = vmatpush1.bf16.msra.mxu0 0
  %93 = vmatprep.subr.bf16.mxu0 0
  %94 = vmatpush1.bf16.msra.mxu0 0
  %95 = vmatprep.subr.bf16.mxu0 0
  %96 = vmatpush1.bf16.msra.mxu0 0
  %97 = vmatprep.subr.bf16.mxu0 0
  %98 = vmatpush1.bf16.msra.mxu0 0
  %99 = vmatprep.subr.bf16.mxu0 0
  %100 = vmatpush1.bf16.msra.mxu0 0
  %101 = vmatprep.subr.bf16.mxu0 0
  %102 = vmatpush1.bf16.msra.mxu0 0
  %103 = vmatprep.subr.bf16.mxu0 0
  %104 = vmatpush1.bf16.msra.mxu0 0
  %105 = vmatprep.subr.bf16.mxu0 0
  %106 = vmatpush1.bf16.msra.mxu0 0
  %107 = vmatprep.subr.bf16.mxu0 0
  %108 = vmatpush1.bf16.msra.mxu0 0
  %109 = vmatprep.subr.bf16.mxu0 0
  %110 = vmatpush1.bf16.msra.mxu0 0
  %111 = vmatprep.subr.bf16.mxu0 0
  %112 = vmatpush1.bf16.msra.mxu0 0
  %113 = vmatprep.subr.bf16.mxu0 0
  %114 = vmatpush1.bf16.msra.mxu0 0
  %115 = vmatprep.subr.bf16.mxu0 0
  %116 = vmatpush1.bf16.msra.mxu0 0
  %117 = vmatprep.mubr.bf16.mxu0 0
  %118 = vmatmul.mubr.bf16.gmra.mrb[0].mxu0 %v68
  %v119 = vpop.f32.mrb[0].mxu0
  %v120 = vadd.f32 0.0, %v119
  %v121 = vpop.f32.mrb[0].mxu0
  %v122 = vpop.f32.mrb[0].mxu0
  %v123 = vadd.f32 0.0, %v122
  %v124 = vpop.f32.mrb[0].mxu0
  %125 = vmatprep.mubr.bf16.mxu0 0
  %126 = vmatmul.mubr.bf16.gmra.mrb[0].mxu0 %v71
  %v127 = vpop.f32.mrb[0].mxu0
  %v128 = vadd.f32 0.0, %v127
  %v129 = vpop.f32.mrb[0].mxu0
  %v130 = vpop.f32.mrb[0].mxu0
  %v131 = vadd.f32 0.0, %v130
  %v132 = vpop.f32.mrb[0].mxu0
  %133 = vmatprep.mubr.bf16.mxu0 0
  %134 = vmatmul.mubr.bf16.gmra.mrb[0].mxu0 %v74
  %v135 = vpop.f32.mrb[0].mxu0
  %v136 = vadd.f32 0.0, %v135
  %v137 = vpop.f32.mrb[0].mxu0
  %v138 = vpop.f32.mrb[0].mxu0
  %v139 = vadd.f32 0.0, %v138
  %v140 = vpop.f32.mrb[0].mxu0
  %141 = vmatprep.mubr.bf16.mxu0 0
  %142 = vmatmul.mubr.bf16.gmra.mrb[0].mxu0 %v77
  %v143 = vpop.f32.mrb[0].mxu0
  %v144 = vadd.f32 0.0, %v143
  %v145 = vpop.f32.mrb[0].mxu0
  %v146 = vpop.f32.mrb[0].mxu0
  %v147 = vpop.f32.mrb[0].mxu0
  %148 = vdwg.mxu0
  %v149 = vld [vmem:[%s2] sm:$0xff]
  %v150 = vld [vmem:[%s2 + $0x8] sm:$0xff]
  %v151 = vld [vmem:[%s2 + $0x10] sm:$0xff]
  %v152 = vld [vmem:[%s2 + $0x18] sm:$0xff]
  %v153 = vld [vmem:[%s2 + $0x20] sm:$0xff]
  %v154 = vld [vmem:[%s2 + $0x28] sm:$0xff]
  %v155 = vld [vmem:[%s2 + $0x30] sm:$0x7]
  %157 = vset.pattern.permute.xlu0 0
  %158 = vperm.xlu0 %157, %v149
  %v159 = vpop.permute.xlu0 %158
  %162 = vset.pattern.permute.xlu0 0
  %163 = vperm.xlu0 %162, %v150
  %v164 = vpop.permute.xlu0 %163
  %167 = vset.pattern.permute.xlu0 0
  %168 = vperm.xlu0 %167, %v151
  %v169 = vpop.permute.xlu0 %168
  %172 = vset.pattern.permute.xlu0 0
  %173 = vperm.xlu0 %172, %v152
  %v174 = vpop.permute.xlu0 %173
  %177 = vset.pattern.permute.xlu0 0
  %178 = vperm.xlu0 %177, %v153
  %v179 = vpop.permute.xlu0 %178
  %182 = vset.pattern.permute.xlu0 0
  %183 = vperm.xlu0 %182, %v154
  %v184 = vpop.permute.xlu0 %183
  %187 = vset.pattern.permute.xlu0 0
  %188 = vperm.xlu0 %187, %v155
  %v189 = vpop.permute.xlu0 %188
  %vm191 = vcmp.eq.f32.partialorder %v120, %v159
  %vm192 = vcmp.eq.f32.partialorder %v123, %v164
  %vm193 = vcmp.eq.f32.partialorder %v128, %v169
  %vm194 = vcmp.eq.f32.partialorder %v131, %v174
  %vm195 = vcmp.eq.f32.partialorder %v136, %v179
  %vm196 = vcmp.eq.f32.partialorder %v139, %v184
  %vm197 = vcmp.eq.f32.partialorder %v144, %v189
  %v198 = vsel %vm191, 1, 0
  %v199 = vsel %vm192, 1, 0
  %v200 = vsel %vm193, 1, 0
  %v201 = vsel %vm194, 1, 0
  %v202 = vsel %vm195, 1, 0
  %v203 = vsel %vm196, 1, 0
  %v204 = vsel %vm197, 1, 0
  %v205 = vcvt.s32.f32 %v198
  %v206 = vcvt.s32.f32 %v199
  %v207 = vcvt.s32.f32 %v200
  %v208 = vcvt.s32.f32 %v201
  %v209 = vcvt.s32.f32 %v202
  %v210 = vcvt.s32.f32 %v203
  %v211 = vcvt.s32.f32 %v204
  %v212 = vld [vmem:[%s3] sm:$0xff]
  %v213 = vld [vmem:[%s3 + $0x8] sm:$0xff]
  %v214 = vld [vmem:[%s3 + $0x10] sm:$0xff]
  %v215 = vld [vmem:[%s3 + $0x18] sm:$0xff]
  %v216 = vld [vmem:[%s3 + $0x20] sm:$0xff]
  %v217 = vld [vmem:[%s3 + $0x28] sm:$0xff]
  %v218 = vld [vmem:[%s3 + $0x30] sm:$0xff]
  %v219 = vld [vmem:[%s3 + $0x38] sm:$0xff]
  %v220 = vld [vmem:[%s4] sm:$0xff]
  %v221 = vld [vmem:[%s4 + $0x8] sm:$0xff]
  %v222 = vld [vmem:[%s4 + $0x10] sm:$0xff]
  %v223 = vld [vmem:[%s4 + $0x18] sm:$0xff]
  %v224 = vld [vmem:[%s4 + $0x20] sm:$0xff]
  %v225 = vld [vmem:[%s4 + $0x28] sm:$0xff]
  %v226 = vld [vmem:[%s4 + $0x30] sm:$0xff]
  %v227 = vld [vmem:[%s4 + $0x38] sm:$0xff]
  %229 = vset.pattern.permute.xlu0 0
  %230 = vperm.xlu0 %229, %v220
  %v231 = vpop.permute.xlu0 %230
  %234 = vset.pattern.permute.xlu0 0
  %235 = vperm.xlu0 %234, %v221
  %v236 = vpop.permute.xlu0 %235
  %239 = vset.pattern.permute.xlu0 0
  %240 = vperm.xlu0 %239, %v222
  %v241 = vpop.permute.xlu0 %240
  %244 = vset.pattern.permute.xlu0 0
  %245 = vperm.xlu0 %244, %v223
  %v246 = vpop.permute.xlu0 %245
  %249 = vset.pattern.permute.xlu0 0
  %250 = vperm.xlu0 %249, %v224
  %v251 = vpop.permute.xlu0 %250
  %254 = vset.pattern.permute.xlu0 0
  %255 = vperm.xlu0 %254, %v225
  %v256 = vpop.permute.xlu0 %255
  %259 = vset.pattern.permute.xlu0 0
  %260 = vperm.xlu0 %259, %v226
  %v261 = vpop.permute.xlu0 %260
  %264 = vset.pattern.permute.xlu0 0
  %265 = vperm.xlu0 %264, %v227
  %v266 = vpop.permute.xlu0 %265
  %vm268 = vcmask 416768
  %v270 = vsel %vm268, %v212, 0
  %v273 = vsel %vm268, %v213, 0
  %v276 = vsel %vm268, %v214, 0
  %v279 = vsel %vm268, %v215, 0
  %v282 = vsel %vm268, %v216, 0
  %v285 = vsel %vm268, %v217, 0
  %v288 = vsel %vm268, %v218, 0
  %v291 = vsel %vm268, %v219, 0
  %vm293 = vcmask 1042432
  %v295 = vsel %vm293, %v211, 0
  %297 = vmatprep.subr.mxu0 0.0
  %298 = vmatpush1.msra.mxu0 %v205
  %299 = vmatprep.subr.mxu0 0.0
  %300 = vmatpush1.msra.mxu0 %v206
  %301 = vmatprep.subr.mxu0 0.0
  %302 = vmatpush1.msra.mxu0 %v207
  %303 = vmatprep.subr.mxu0 0.0
  %304 = vmatpush1.msra.mxu0 %v208
  %305 = vmatprep.subr.mxu0 0.0
  %306 = vmatpush1.msra.mxu0 %v209
  %307 = vmatprep.subr.mxu0 0.0
  %308 = vmatpush1.msra.mxu0 %v210
  %309 = vmatprep.subr.mxu0 0.0
  %310 = vmatpush1.msra.mxu0 %v295
  %311 = vmatprep.subr.mxu0 0.0
  %312 = vmatpush1.msra.mxu0 0.0
  %313 = vmatprep.subr.mxu0 0.0
  %314 = vmatpush1.msra.mxu0 0.0
  %315 = vmatprep.subr.mxu0 0.0
  %316 = vmatpush1.msra.mxu0 0.0
  %317 = vmatprep.subr.mxu0 0.0
  %318 = vmatpush1.msra.mxu0 0.0
  %319 = vmatprep.subr.mxu0 0.0
  %320 = vmatpush1.msra.mxu0 0.0
  %321 = vmatprep.subr.mxu0 0.0
  %322 = vmatpush1.msra.mxu0 0.0
  %323 = vmatprep.subr.mxu0 0.0
  %324 = vmatpush1.msra.mxu0 0.0
  %325 = vmatprep.subr.mxu0 0.0
  %326 = vmatpush1.msra.mxu0 0.0
  %327 = vmatprep.subr.mxu0 0.0
  %328 = vmatpush1.msra.mxu0 0.0
  %329 = vmatprep.subr.mxu0 0.0
  %330 = vmatpush1.msra.mxu0 0.0
  %331 = vmatprep.subr.mxu0 0.0
  %332 = vmatpush1.msra.mxu0 0.0
  %333 = vmatprep.subr.mxu0 0.0
  %334 = vmatpush1.msra.mxu0 0.0
  %335 = vmatprep.subr.mxu0 0.0
  %336 = vmatpush1.msra.mxu0 0.0
  %337 = vmatprep.subr.mxu0 0.0
  %338 = vmatpush1.msra.mxu0 0.0
  %339 = vmatprep.subr.mxu0 0.0
  %340 = vmatpush1.msra.mxu0 0.0
  %341 = vmatprep.subr.mxu0 0.0
  %342 = vmatpush1.msra.mxu0 0.0
  %343 = vmatprep.subr.mxu0 0.0
  %344 = vmatpush1.msra.mxu0 0.0
  %345 = vmatprep.subr.mxu0 0.0
  %346 = vmatpush1.msra.mxu0 0.0
  %347 = vmatprep.subr.mxu0 0.0
  %348 = vmatpush1.msra.mxu0 0.0
  %349 = vmatprep.subr.mxu0 0.0
  %350 = vmatpush1.msra.mxu0 0.0
  %351 = vmatprep.subr.mxu0 0.0
  %352 = vmatpush1.msra.mxu0 0.0
  %353 = vmatprep.subr.mxu0 0.0
  %354 = vmatpush1.msra.mxu0 0.0
  %355 = vmatprep.subr.mxu0 0.0
  %356 = vmatpush1.msra.mxu0 0.0
  %357 = vmatprep.subr.mxu0 0.0
  %358 = vmatpush1.msra.mxu0 0.0
  %359 = vmatprep.subr.mxu0 0.0
  %360 = vmatpush1.msra.mxu0 0.0
  %361 = vmatprep.mubr.f32.mxu0 0.0
  %362 = vmatmul.mubr.f32.gmra.mrb[0].mxu0 %v270
  %v363 = vpop.f32.mrb[0].mxu0
  %v364 = vadd.f32 %v231, %v363
  %v365 = vpop.f32.mrb[0].mxu0
  %366 = vmatprep.mubr.f32.mxu0 0.0
  %367 = vmatmul.mubr.f32.gmra.mrb[0].mxu0 %v273
  %v368 = vpop.f32.mrb[0].mxu0
  %v369 = vadd.f32 %v236, %v368
  %v370 = vpop.f32.mrb[0].mxu0
  %371 = vmatprep.mubr.f32.mxu0 0.0
  %372 = vmatmul.mubr.f32.gmra.mrb[0].mxu0 %v276
  %v373 = vpop.f32.mrb[0].mxu0
  %v374 = vadd.f32 %v241, %v373
  %v375 = vpop.f32.mrb[0].mxu0
  %376 = vmatprep.mubr.f32.mxu0 0.0
  %377 = vmatmul.mubr.f32.gmra.mrb[0].mxu0 %v279
  %v378 = vpop.f32.mrb[0].mxu0
  %v379 = vadd.f32 %v246, %v378
  %v380 = vpop.f32.mrb[0].mxu0
  %381 = vmatprep.mubr.f32.mxu0 0.0
  %382 = vmatmul.mubr.f32.gmra.mrb[0].mxu0 %v282
  %v383 = vpop.f32.mrb[0].mxu0
  %v384 = vadd.f32 %v251, %v383
  %v385 = vpop.f32.mrb[0].mxu0
  %386 = vmatprep.mubr.f32.mxu0 0.0
  %387 = vmatmul.mubr.f32.gmra.mrb[0].mxu0 %v285
  %v388 = vpop.f32.mrb[0].mxu0
  %v389 = vadd.f32 %v256, %v388
  %v390 = vpop.f32.mrb[0].mxu0
  %391 = vmatprep.mubr.f32.mxu0 0.0
  %392 = vmatmul.mubr.f32.gmra.mrb[0].mxu0 %v288
  %v393 = vpop.f32.mrb[0].mxu0
  %v394 = vadd.f32 %v261, %v393
  %v395 = vpop.f32.mrb[0].mxu0
  %396 = vmatprep.mubr.f32.mxu0 0.0
  %397 = vmatmul.mubr.f32.gmra.mrb[0].mxu0 %v291
  %v398 = vpop.f32.mrb[0].mxu0
  %v399 = vadd.f32 %v266, %v398
  %v400 = vpop.f32.mrb[0].mxu0
  %401 = vdwg.mxu0
  %v402 = vmax.f32 %v364, 0.0
  %v403 = vmax.f32 %v369, 0.0
  %v404 = vmax.f32 %v374, 0.0
  %v405 = vmax.f32 %v379, 0.0
  %v406 = vmax.f32 %v384, 0.0
  %v407 = vmax.f32 %v389, 0.0
  %v408 = vmax.f32 %v394, 0.0
  %v409 = vmax.f32 %v399, 0.0
  %v410 = vld [vmem:[%s5] sm:$0xff]
  %v411 = vld [vmem:[%s5 + $0x8] sm:$0xff]
  %v412 = vld [vmem:[%s5 + $0x10] sm:$0xff]
  %v413 = vld [vmem:[%s5 + $0x18] sm:$0xff]
  %v414 = vld [vmem:[%s5 + $0x20] sm:$0xff]
  %v415 = vld [vmem:[%s5 + $0x28] sm:$0xff]
  %v416 = vld [vmem:[%s5 + $0x30] sm:$0xff]
  %v417 = vld [vmem:[%s5 + $0x38] sm:$0xff]
  %419 = vset.pattern.permute.xlu0 0
  %420 = vperm.xlu0 %419, %v410
  %v421 = vpop.permute.xlu0 %420
  %424 = vset.pattern.permute.xlu0 0
  %425 = vperm.xlu0 %424, %v411
  %v426 = vpop.permute.xlu0 %425
  %429 = vset.pattern.permute.xlu0 0
  %430 = vperm.xlu0 %429, %v412
  %v431 = vpop.permute.xlu0 %430
  %434 = vset.pattern.permute.xlu0 0
  %435 = vperm.xlu0 %434, %v413
  %v436 = vpop.permute.xlu0 %435
  %439 = vset.pattern.permute.xlu0 0
  %440 = vperm.xlu0 %439, %v414
  %v441 = vpop.permute.xlu0 %440
  %444 = vset.pattern.permute.xlu0 0
  %445 = vperm.xlu0 %444, %v415
  %v446 = vpop.permute.xlu0 %445
  %449 = vset.pattern.permute.xlu0 0
  %450 = vperm.xlu0 %449, %v416
  %v451 = vpop.permute.xlu0 %450
  %454 = vset.pattern.permute.xlu0 0
  %455 = vperm.xlu0 %454, %v417
  %v456 = vpop.permute.xlu0 %455
  %v458 = vmul.f32 %v402, %v421
  %v459 = vmul.f32 %v403, %v426
  %v460 = vmul.f32 %v404, %v431
  %v461 = vmul.f32 %v405, %v436
  %v462 = vmul.f32 %v406, %v441
  %v463 = vmul.f32 %v407, %v446
  %v464 = vmul.f32 %v408, %v451
  %v465 = vmul.f32 %v409, %v456
  %v466 = vadd.f32 %v458, %v459
  %v467 = vadd.f32 %v466, %v460
  %v468 = vadd.f32 %v467, %v461
  %v469 = vadd.f32 %v468, %v462
  %v470 = vadd.f32 %v469, %v463
  %v471 = vadd.f32 %v470, %v464
  %v472 = vadd.f32 %v471, %v465
  %v473 = vrot.slane %v472, 4
  %v474 = vadd.f32 %v472, %v473
  %v475 = vrot.slane %v474, 2
  %v476 = vadd.f32 %v474, %v475
  %v477 = vrot.slane %v476, 1
  %v478 = vadd.f32 %v476, %v477
  %v479 = vld [vmem:[#allocation2] sm:$0x1]
  %481 = vset.pattern.permute.xlu0 0
  %482 = vperm.xlu0 %481, %v479
  %v483 = vpop.permute.xlu0 %482
  %v485 = vlaneseq
  %v486 = vshrl.u32 %v485, 7
  %v487 = vsub.s32 0, %v486
  %v488 = vrot.slane %v483, %v487
  %v489 = vadd.f32 %v478, %v488
  %490 = vst [vmem:[%s7] sm:$0x1] %v489
  // Predicated region
  $region30: #{mlp_regressor_forward.1} parent=0 // pred_check
    _
  $region31: #{mlp_regressor_forward.1} parent=0 // pred_check_branch
    %492 = sbr.rel (0) target = $region33
  $region32: #{mlp_regressor_forward.1} parent=0 // pred_region
    _
  $region33: #{mlp_regressor_forward.1} parent=0 // pred_fallthru
    _
  // Predicated region
  $region34: #{mlp_regressor_forward.1} parent=0 // pred_check
    _
  $region35: #{mlp_regressor_forward.1} parent=0 // pred_check_branch
    %494 = sbr.rel (0) target = $region37
  $region36: #{mlp_regressor_forward.1} parent=0 // pred_region
    _
  $region37: #{mlp_regressor_forward.1} parent=0 // pred_fallthru
    _

</llo_original>
